<compile_context>
chip_gen: v5e
topology: v5e:2x2
jax: 0.10.0
libtpu: 0.0.40
codegen_flags: <defaults>
</compile_context>

<pallas_src>
import functools
import math

import jax
import jax.numpy as jnp
from jax import lax
from jax.experimental import pallas as pl
from jax.experimental.pallas import tpu as pltpu

LEAKY_SLOPE = 0.2
BN_EPS = 1e-5
KW = 4        # conv kernel size used by the module
PADW = 1      # conv padding used by the module
LANE = 128


def _round_up(x, m):
    return (x + m - 1) // m * m


def _vmem_limit_bytes(per_step_bytes):
    cap = 64 << 20
    try:
        cap = int(pltpu.get_tpu_info().vmem_capacity_bytes)
    except Exception:
        pass
    want = max(32 << 20, 2 * int(per_step_bytes) + (8 << 20))
    return int(min(want, (cap * 4) // 5))


# ---------------------------------------------------------------------------
# In-kernel helpers
# ---------------------------------------------------------------------------
def _transform(v, sc, sh, *, in_transform, in_act):
    """Fused previous-layer BatchNorm (scale*y + shift) + LeakyReLU on load."""
    if not in_transform:
        return v                              # already bf16, already activated
    v = v.astype(jnp.float32) * sc + sh
    if in_act:
        v = jnp.where(v >= 0, v, LEAKY_SLOPE * v)
    return v.astype(jnp.bfloat16)


def _row_taps(x_ref, sc, sh, r, *, stride, n_cols, in_transform, in_act):
    """Load + transform the input rows needed for output row `r`; return a
    closure tap(i, j) -> (n_cols, Cin) bf16 slice for conv tap (i, j)."""
    if stride == 1:
        # x_ref block: (1, Hp, Wp, Cin)
        rows = [_transform(x_ref[0, i + r], sc, sh,
                           in_transform=in_transform, in_act=in_act)
                for i in range(KW)]

        def tap(i, j):
            return rows[i][j:j + n_cols, :]
    else:
        # x_ref block: (1, 4, H2, W2, Cin); parity q = (i%2)*2 + (j%2)
        rows = {}
        for q in range(4):
            for di in range(2):
                rows[(q, di)] = _transform(x_ref[0, q, di + r], sc, sh,
                                           in_transform=in_transform,
                                           in_act=in_act)

        def tap(i, j):
            q = (i % 2) * 2 + (j % 2)
            dj = j // 2
            return rows[(q, i // 2)][dj:dj + n_cols, :]
    return tap


def _conv_row(tap, w_ref, b, *, n_cols, tco):
    acc = jnp.zeros((n_cols, tco), jnp.float32)
    for i in range(KW):
        for j in range(KW):
            acc = acc + jnp.dot(tap(i, j), w_ref[i * KW + j],
                                preferred_element_type=jnp.float32)
    return acc + b


def _conv_finish_kernel(x_ref, w_ref, b_ref, sc_ref, sh_ref, y_ref, *,
                        stride, n_rows, n_cols, in_transform, in_act, out_act):
    """Conv (+fused input transform) + bias (+LeakyReLU) -> bf16 output."""
    tco = y_ref.shape[-1]
    sc = sc_ref[...] if in_transform else None
    sh = sh_ref[...] if in_transform else None
    b = b_ref[...]

    def body(r, carry):
        tap = _row_taps(x_ref, sc, sh, r, stride=stride, n_cols=n_cols,
                        in_transform=in_transform, in_act=in_act)
        acc = _conv_row(tap, w_ref, b, n_cols=n_cols, tco=tco)
        if out_act:
            acc = jnp.where(acc >= 0, acc, LEAKY_SLOPE * acc)
        y_ref[0, r] = acc.astype(y_ref.dtype)
        return carry

    lax.fori_loop(0, n_rows, body, 0)


def _conv_stats_kernel(x_ref, w_ref, b_ref, sc_ref, sh_ref,
                       y_ref, sum_ref, sq_ref, *,
                       stride, n_rows, n_cols, in_transform, in_act):
    """Conv (+fused input transform) -> raw bf16 output + per-channel partial
    sum / sum-of-squares (computed from the f32 accumulator)."""
    tco = y_ref.shape[-1]
    sc = sc_ref[...] if in_transform else None
    sh = sh_ref[...] if in_transform else None
    b = b_ref[...]
    sum_ref[...] = jnp.zeros_like(sum_ref)
    sq_ref[...] = jnp.zeros_like(sq_ref)

    def body(r, carry):
        tap = _row_taps(x_ref, sc, sh, r, stride=stride, n_cols=n_cols,
                        in_transform=in_transform, in_act=in_act)
        acc = _conv_row(tap, w_ref, b, n_cols=n_cols, tco=tco)
        y_ref[0, r] = acc.astype(y_ref.dtype)
        sum_ref[0] += jnp.sum(acc, axis=0, keepdims=True)
        sq_ref[0] += jnp.sum(acc * acc, axis=0, keepdims=True)
        return carry

    lax.fori_loop(0, n_rows, body, 0)


# ---------------------------------------------------------------------------
# Per-layer wrapper: spatial pad (+parity split for stride 2) + pallas_call
# ---------------------------------------------------------------------------
def conv_layer(x, p, pending):
    """x: (N, H, W, Cin_p) bf16 NHWC (raw if `pending` is set).
    pending: None, or (scale, shift, act) of the previous BN layer, to be fused
    into this layer's input load.  Returns (y, pending_next)."""
    n, h, w_sp, cin_p = x.shape
    kh, kw, cin_r, cout_r = p["w"].shape
    stride = p["stride"]
    cout_p = _round_up(cout_r, LANE)
    tco = 256 if cout_p % 256 == 0 else LANE
    n_co = cout_p // tco

    in_transform = pending is not None
    if in_transform:
        in_scale, in_shift, in_act = pending
        pad_val = jnp.where(in_scale != 0.0, -in_shift / in_scale, 0.0)
    else:
        in_scale = jnp.ones((cin_p,), jnp.float32)
        in_shift = jnp.zeros((cin_p,), jnp.float32)
        in_act = False
        pad_val = jnp.zeros((cin_p,), jnp.float32)

    # Parameters padded so padded in/out channels stay exactly zero / inert.
    w_p = jnp.pad(p["w"], ((0, 0), (0, 0),
                           (0, cin_p - cin_r), (0, cout_p - cout_r)))
    w_mat = w_p.reshape(kh * kw, cin_p, cout_p).astype(jnp.bfloat16)
    b_p = jnp.pad(p["b"], (0, cout_p - cout_r)).reshape(1, cout_p)
    b_p = b_p.astype(jnp.float32)
    sc = in_scale.reshape(1, cin_p).astype(jnp.float32)
    sh = in_shift.reshape(1, cin_p).astype(jnp.float32)

    # Spatial pad with the per-channel value the fused transform maps to 0.
    oh = (h + 2 * PADW - KW) // stride + 1
    ow = (w_sp + 2 * PADW - KW) // stride + 1
    hp, wp = h + 2 * PADW, w_sp + 2 * PADW
    if stride == 2:                      # keep spatial dims even for the split
        hp += hp % 2
        wp += wp % 2
    xp = jnp.broadcast_to(pad_val.astype(jnp.bfloat16).reshape(1, 1, 1, cin_p),
                          (n, hp, wp, cin_p))
    xp = xp.at[:, PADW:PADW + h, PADW:PADW + w_sp, :].set(x)

    if stride == 2:
        # Parity split: xs[n, q, a, b, c] = xp[n, 2a + q//2, 2b + q%2, c]
        h2, w2 = hp // 2, wp // 2
        xp = xp.reshape(n, h2, 2, w2, 2, cin_p).transpose(0, 2, 4, 1, 3, 5)
        xp = xp.reshape(n, 4, h2, w2, cin_p)
        x_spec = pl.BlockSpec((1, 4, h2, w2, cin_p),
                              lambda i, co: (i, 0, 0, 0, 0))
        x_bytes = 4 * h2 * w2 * cin_p * 2
    else:
        x_spec = pl.BlockSpec((1, hp, wp, cin_p), lambda i, co: (i, 0, 0, 0))
        x_bytes = hp * wp * cin_p * 2

    w_spec = pl.BlockSpec((kh * kw, cin_p, tco), lambda i, co: (0, 0, co))
    b_spec = pl.BlockSpec((1, tco), lambda i, co: (0, co))
    v_spec = pl.BlockSpec((1, cin_p), lambda i, co: (0, 0))
    y_spec = pl.BlockSpec((1, oh, ow, tco), lambda i, co: (i, 0, 0, co))
    stat_spec = pl.BlockSpec((1, 1, tco), lambda i, co: (i, 0, co))

    grid = (n, n_co)
    flops = 2 * n * oh * ow * (kh * kw * cin_p) * cout_p
    bytes_est = n * x_bytes + w_mat.size * 2 + n * oh * ow * cout_p * 2
    cost = pl.CostEstimate(flops=int(flops), transcendentals=0,
                           bytes_accessed=int(bytes_est))
    work = x_bytes + kh * kw * cin_p * tco * 2 + oh * ow * tco * 6 + ow * tco * 8
    cparams = pltpu.CompilerParams(
        dimension_semantics=("parallel", "parallel"),
        vmem_limit_bytes=_vmem_limit_bytes(work))
    # TODO(synk): for very large images, tile the output rows (halo DMA) and
    # single-buffer the constant-index weight tile (pl.Buffered(1)) to cut the
    # per-step VMEM footprint on v7x's 64 MiB.

    common = dict(stride=stride, n_rows=oh, n_cols=ow,
                  in_transform=in_transform, in_act=in_act)

    if p["use_bn"]:
        kern = functools.partial(_conv_stats_kernel, **common)
        y, s1, s2 = pl.pallas_call(
            kern, grid=grid,
            in_specs=[x_spec, w_spec, b_spec, v_spec, v_spec],
            out_specs=(y_spec, stat_spec, stat_spec),
            out_shape=(jax.ShapeDtypeStruct((n, oh, ow, cout_p), jnp.bfloat16),
                       jax.ShapeDtypeStruct((n, 1, cout_p), jnp.float32),
                       jax.ShapeDtypeStruct((n, 1, cout_p), jnp.float32)),
            compiler_params=cparams, cost_estimate=cost,
        )(xp, w_mat, b_p, sc, sh)

        # Tiny per-channel math: training-mode BatchNorm (biased variance).
        # One-pass E[y^2]-E[y]^2 on partial sums; fine for BN-scale conv
        # activations (mean << std); clamp guards against tiny negative var.
        count = float(n * oh * ow)
        csum = jnp.sum(s1, axis=(0, 1))
        csq = jnp.sum(s2, axis=(0, 1))
        mean = csum / count
        var = jnp.maximum(csq / count - mean * mean, 0.0)
        g_p = jnp.pad(p["gamma"], (0, cout_p - cout_r), constant_values=1.0)
        be_p = jnp.pad(p["beta"], (0, cout_p - cout_r))
        scale = g_p * lax.rsqrt(var + BN_EPS)
        shift = be_p - mean * scale
        return y, (scale, shift, p["use_act"])

    kern = functools.partial(_conv_finish_kernel, **common,
                             out_act=p["use_act"])
    y = pl.pallas_call(
        kern, grid=grid,
        in_specs=[x_spec, w_spec, b_spec, v_spec, v_spec],
        out_specs=y_spec,
        out_shape=jax.ShapeDtypeStruct((n, oh, ow, cout_p), jnp.bfloat16),
        compiler_params=cparams, cost_estimate=cost,
    )(xp, w_mat, b_p, sc, sh)
    return y, None


# ---------------------------------------------------------------------------
# Parameter construction (deterministic, mirrors the module's __init__ shapes)
# ---------------------------------------------------------------------------
def init_params(key, input_nc, ndf=64, n_layers=3):
    # norm_layer = nn.BatchNorm2d  =>  use_bias = False for the middle convs.
    cfgs = [(input_nc, ndf, 2, True, False, True)]   # (cin,cout,s,bias,bn,act)
    nf_mult = 1
    for n in range(1, n_layers):
        nf_prev, nf_mult = nf_mult, min(2 ** n, 8)
        cfgs.append((ndf * nf_prev, ndf * nf_mult, 2, False, True, True))
    nf_prev, nf_mult = nf_mult, min(2 ** n_layers, 8)
    cfgs.append((ndf * nf_prev, ndf * nf_mult, 1, False, True, True))
    cfgs.append((ndf * nf_mult, 1, 1, True, False, False))

    params = []
    for (cin, cout, stride, use_bias, use_bn, use_act) in cfgs:
        key, k_w, k_b = jax.random.split(key, 3)
        bound = 1.0 / math.sqrt(cin * KW * KW)
        w = jax.random.uniform(k_w, (KW, KW, cin, cout), jnp.float32,
                               -bound, bound)
        b = (jax.random.uniform(k_b, (cout,), jnp.float32, -bound, bound)
             if use_bias else jnp.zeros((cout,), jnp.float32))
        gamma = jnp.ones((cout,), jnp.float32)   # BatchNorm default init
        beta = jnp.zeros((cout,), jnp.float32)
        params.append(dict(w=w, b=b, gamma=gamma, beta=beta, stride=stride,
                           use_bn=use_bn, use_act=use_act))
    return params


def nlayer_discriminator(x_nchw, params):
    """Forward pass. Input/output are NCHW like the PyTorch module."""
    x = jnp.transpose(x_nchw, (0, 2, 3, 1))                  # NCHW -> NHWC
    cin = x.shape[-1]
    cin_p = _round_up(cin, 8)                                 # sublane-friendly
    x = jnp.pad(x, ((0, 0), (0, 0), (0, 0), (0, cin_p - cin)))
    x = x.astype(jnp.bfloat16)

    pending = None
    for p in params:
        x, pending = conv_layer(x, p, pending)

    if pending is not None:        # only if the last layer had BN (not here)
        scale, shift, act = pending
        xf = x.astype(jnp.float32) * scale + shift
        x = jnp.where(xf >= 0, xf, LEAKY_SLOPE * xf) if act else xf

    cout_last = params[-1]["w"].shape[-1]
    x = x[..., :cout_last].astype(jnp.float32)                # drop lane pad
    return jnp.transpose(x, (0, 3, 1, 2))                     # NHWC -> NCHW
    # TODO(synk): training-mode BatchNorm running-statistics update is a
    # stateful side effect with no influence on the forward output; not modeled.


# ---------------------------------------------------------------------------
# Pure-JAX f32 reference (module semantics) for the correctness check
# ---------------------------------------------------------------------------
def ref_forward(x_nchw, params):
    x = jnp.transpose(x_nchw, (0, 2, 3, 1))
    for p in params:
        s = p["stride"]
        y = lax.conv_general_dilated(
            x, p["w"], (s, s), [(PADW, PADW), (PADW, PADW)],
            dimension_numbers=("NHWC", "HWIO", "NHWC"))
        y = y + p["b"]
        if p["use_bn"]:
            m = jnp.mean(y, axis=(0, 1, 2), keepdims=True)
            v = jnp.mean(jnp.square(y - m), axis=(0, 1, 2), keepdims=True)
            y = (y - m) * lax.rsqrt(v + BN_EPS)
            y = y * p["gamma"] + p["beta"]
        if p["use_act"]:
            y = jnp.where(y >= 0, y, LEAKY_SLOPE * y)
        x = y
    return jnp.transpose(x, (0, 3, 1, 2))


if __name__ == "__main__":
    key = jax.random.PRNGKey(0)
    k_x, k_p = jax.random.split(key)

    # Smallest shapes for which the default n_layers=3 stack of k=4 convs
    # still produces a valid (non-empty) PatchGAN output map.
    input_nc, ndf, n_layers = 4, 16, 3
    x = jax.random.normal(k_x, (2, input_nc, 32, 32), jnp.float32)
    params = init_params(k_p, input_nc, ndf=ndf, n_layers=n_layers)

    out = jax.block_until_ready(nlayer_discriminator(x, params))
    ref = ref_forward(x, params)

    assert out.shape == (2, 1, 2, 2), out.shape
    # bf16 MXU inputs / bf16 stored activations with f32 accumulation vs a
    # pure-f32 reference: check relative L2 error.
    rel = float(jnp.linalg.norm(out - ref) / (jnp.linalg.norm(ref) + 1e-12))
    assert rel < 3e-2, f"relative L2 error too large: {rel}"
    print("KERNEL_OK")
</pallas_src>

<mosaic_0001>
module attributes {stable_mosaic.version = 11 : i64} {
  func.func @_conv_finish_kernel(%arg0: i32, %arg1: i32, %arg2: memref<1x4x17x17x8xbf16, #tpu.memory_space<vmem>>, %arg3: memref<16x8x128xbf16, #tpu.memory_space<vmem>>, %arg4: memref<1x128xf32, #tpu.memory_space<vmem>>, %arg5: memref<1x8xf32, #tpu.memory_space<vmem>>, %arg6: memref<1x8xf32, #tpu.memory_space<vmem>>, %arg7: memref<1x16x16x128xbf16, #tpu.memory_space<vmem>>) attributes {dimension_semantics = [#tpu.dimension_semantics<parallel>, #tpu.dimension_semantics<parallel>], iteration_bounds = array<i64: 2, 1>, scalar_prefetch = 0 : i64, scratch_operands = 0 : i64, tpu.core_type = #tpu.core_type<tc>, window_params = [{transform_indices = @transform_0, window_bounds = array<i64: 1, 4, 17, 17, 8>}, {transform_indices = @transform_1, window_bounds = array<i64: 16, 8, 128>}, {transform_indices = @transform_2, window_bounds = array<i64: 1, 128>}, {pipeline_mode = #tpu.pipeline_mode<synchronous>, transform_indices = @transform_3, window_bounds = array<i64: 1, 8>}, {pipeline_mode = #tpu.pipeline_mode<synchronous>, transform_indices = @transform_4, window_bounds = array<i64: 1, 8>}, {transform_indices = @transform_5, window_bounds = array<i64: 1, 16, 16, 128>}]} {
    %c0 = arith.constant 0 : index
    %c0_0 = arith.constant 0 : index
    %0 = vector.load %arg4[%c0, %c0_0] : memref<1x128xf32, #tpu.memory_space<vmem>>, vector<1x128xf32>
    %c0_i32 = arith.constant 0 : i32
    %c16_i32 = arith.constant 16 : i32
    %1 = arith.addi %c0_i32, %c16_i32 : i32
    %c1_i32 = arith.constant 1 : i32
    scf.for %arg8 = %c0_i32 to %1 step %c1_i32  : i32 {
      %c0_i32_2 = arith.constant 0 : i32
      %2 = arith.addi %c0_i32_2, %arg8 : i32
      %c0_3 = arith.constant 0 : index
      %c0_4 = arith.constant 0 : index
      %3 = arith.index_cast %2 : i32 to index
      %c0_5 = arith.constant 0 : index
      %c0_6 = arith.constant 0 : index
      %4 = vector.load %arg2[%c0_3, %c0_4, %3, %c0_5, %c0_6] : memref<1x4x17x17x8xbf16, #tpu.memory_space<vmem>>, vector<1x1x1x17x8xbf16>
      %5 = vector.shape_cast %4 : vector<1x1x1x17x8xbf16> to vector<17x8xbf16>
      %c1_i32_7 = arith.constant 1 : i32
      %6 = arith.addi %c1_i32_7, %arg8 : i32
      %c0_8 = arith.constant 0 : index
      %c0_9 = arith.constant 0 : index
      %7 = arith.index_cast %6 : i32 to index
      %c0_10 = arith.constant 0 : index
      %c0_11 = arith.constant 0 : index
      %8 = vector.load %arg2[%c0_8, %c0_9, %7, %c0_10, %c0_11] : memref<1x4x17x17x8xbf16, #tpu.memory_space<vmem>>, vector<1x1x1x17x8xbf16>
      %9 = vector.shape_cast %8 : vector<1x1x1x17x8xbf16> to vector<17x8xbf16>
      %c0_i32_12 = arith.constant 0 : i32
      %10 = arith.addi %c0_i32_12, %arg8 : i32
      %c0_13 = arith.constant 0 : index
      %c1 = arith.constant 1 : index
      %11 = arith.index_cast %10 : i32 to index
      %c0_14 = arith.constant 0 : index
      %c0_15 = arith.constant 0 : index
      %12 = vector.load %arg2[%c0_13, %c1, %11, %c0_14, %c0_15] : memref<1x4x17x17x8xbf16, #tpu.memory_space<vmem>>, vector<1x1x1x17x8xbf16>
      %13 = vector.shape_cast %12 : vector<1x1x1x17x8xbf16> to vector<17x8xbf16>
      %c1_i32_16 = arith.constant 1 : i32
      %14 = arith.addi %c1_i32_16, %arg8 : i32
      %c0_17 = arith.constant 0 : index
      %c1_18 = arith.constant 1 : index
      %15 = arith.index_cast %14 : i32 to index
      %c0_19 = arith.constant 0 : index
      %c0_20 = arith.constant 0 : index
      %16 = vector.load %arg2[%c0_17, %c1_18, %15, %c0_19, %c0_20] : memref<1x4x17x17x8xbf16, #tpu.memory_space<vmem>>, vector<1x1x1x17x8xbf16>
      %17 = vector.shape_cast %16 : vector<1x1x1x17x8xbf16> to vector<17x8xbf16>
      %c0_i32_21 = arith.constant 0 : i32
      %18 = arith.addi %c0_i32_21, %arg8 : i32
      %c0_22 = arith.constant 0 : index
      %c2 = arith.constant 2 : index
      %19 = arith.index_cast %18 : i32 to index
      %c0_23 = arith.constant 0 : index
      %c0_24 = arith.constant 0 : index
      %20 = vector.load %arg2[%c0_22, %c2, %19, %c0_23, %c0_24] : memref<1x4x17x17x8xbf16, #tpu.memory_space<vmem>>, vector<1x1x1x17x8xbf16>
      %21 = vector.shape_cast %20 : vector<1x1x1x17x8xbf16> to vector<17x8xbf16>
      %c1_i32_25 = arith.constant 1 : i32
      %22 = arith.addi %c1_i32_25, %arg8 : i32
      %c0_26 = arith.constant 0 : index
      %c2_27 = arith.constant 2 : index
      %23 = arith.index_cast %22 : i32 to index
      %c0_28 = arith.constant 0 : index
      %c0_29 = arith.constant 0 : index
      %24 = vector.load %arg2[%c0_26, %c2_27, %23, %c0_28, %c0_29] : memref<1x4x17x17x8xbf16, #tpu.memory_space<vmem>>, vector<1x1x1x17x8xbf16>
      %25 = vector.shape_cast %24 : vector<1x1x1x17x8xbf16> to vector<17x8xbf16>
      %c0_i32_30 = arith.constant 0 : i32
      %26 = arith.addi %c0_i32_30, %arg8 : i32
      %c0_31 = arith.constant 0 : index
      %c3 = arith.constant 3 : index
      %27 = arith.index_cast %26 : i32 to index
      %c0_32 = arith.constant 0 : index
      %c0_33 = arith.constant 0 : index
      %28 = vector.load %arg2[%c0_31, %c3, %27, %c0_32, %c0_33] : memref<1x4x17x17x8xbf16, #tpu.memory_space<vmem>>, vector<1x1x1x17x8xbf16>
      %29 = vector.shape_cast %28 : vector<1x1x1x17x8xbf16> to vector<17x8xbf16>
      %c1_i32_34 = arith.constant 1 : i32
      %30 = arith.addi %c1_i32_34, %arg8 : i32
      %c0_35 = arith.constant 0 : index
      %c3_36 = arith.constant 3 : index
      %31 = arith.index_cast %30 : i32 to index
      %c0_37 = arith.constant 0 : index
      %c0_38 = arith.constant 0 : index
      %32 = vector.load %arg2[%c0_35, %c3_36, %31, %c0_37, %c0_38] : memref<1x4x17x17x8xbf16, #tpu.memory_space<vmem>>, vector<1x1x1x17x8xbf16>
      %33 = vector.shape_cast %32 : vector<1x1x1x17x8xbf16> to vector<17x8xbf16>
      %cst = arith.constant 0.000000e+00 : f32
      %34 = vector.broadcast %cst : f32 to vector<16x128xf32>
      %35 = vector.extract_strided_slice %5 {offsets = [0, 0], sizes = [16, 8], strides = [1, 1]} : vector<17x8xbf16> to vector<16x8xbf16>
      %c0_39 = arith.constant 0 : index
      %c0_40 = arith.constant 0 : index
      %c0_41 = arith.constant 0 : index
      %36 = vector.load %arg3[%c0_39, %c0_40, %c0_41] : memref<16x8x128xbf16, #tpu.memory_space<vmem>>, vector<1x8x128xbf16>
      %37 = vector.shape_cast %36 : vector<1x8x128xbf16> to vector<8x128xbf16>
      %cst_42 = arith.constant dense<0.000000e+00> : vector<16x128xf32>
      %38 = tpu.matmul %35, %37, %cst_42 {dimension_numbers = #tpu.dot_dimension_numbers<[1], [0], [0], [1], [0, 0, 1, 1], [], []>} : vector<16x8xbf16>, vector<8x128xbf16>, vector<16x128xf32> -> vector<16x128xf32>
      %39 = arith.addf %34, %38 : vector<16x128xf32>
      %40 = vector.extract_strided_slice %13 {offsets = [0, 0], sizes = [16, 8], strides = [1, 1]} : vector<17x8xbf16> to vector<16x8xbf16>
      %c1_43 = arith.constant 1 : index
      %c0_44 = arith.constant 0 : index
      %c0_45 = arith.constant 0 : index
      %41 = vector.load %arg3[%c1_43, %c0_44, %c0_45] : memref<16x8x128xbf16, #tpu.memory_space<vmem>>, vector<1x8x128xbf16>
      %42 = vector.shape_cast %41 : vector<1x8x128xbf16> to vector<8x128xbf16>
      %cst_46 = arith.constant dense<0.000000e+00> : vector<16x128xf32>
      %43 = tpu.matmul %40, %42, %cst_46 {dimension_numbers = #tpu.dot_dimension_numbers<[1], [0], [0], [1], [0, 0, 1, 1], [], []>} : vector<16x8xbf16>, vector<8x128xbf16>, vector<16x128xf32> -> vector<16x128xf32>
      %44 = arith.addf %39, %43 : vector<16x128xf32>
      %45 = vector.extract_strided_slice %5 {offsets = [1, 0], sizes = [16, 8], strides = [1, 1]} : vector<17x8xbf16> to vector<16x8xbf16>
      %c2_47 = arith.constant 2 : index
      %c0_48 = arith.constant 0 : index
      %c0_49 = arith.constant 0 : index
      %46 = vector.load %arg3[%c2_47, %c0_48, %c0_49] : memref<16x8x128xbf16, #tpu.memory_space<vmem>>, vector<1x8x128xbf16>
      %47 = vector.shape_cast %46 : vector<1x8x128xbf16> to vector<8x128xbf16>
      %cst_50 = arith.constant dense<0.000000e+00> : vector<16x128xf32>
      %48 = tpu.matmul %45, %47, %cst_50 {dimension_numbers = #tpu.dot_dimension_numbers<[1], [0], [0], [1], [0, 0, 1, 1], [], []>} : vector<16x8xbf16>, vector<8x128xbf16>, vector<16x128xf32> -> vector<16x128xf32>
      %49 = arith.addf %44, %48 : vector<16x128xf32>
      %50 = vector.extract_strided_slice %13 {offsets = [1, 0], sizes = [16, 8], strides = [1, 1]} : vector<17x8xbf16> to vector<16x8xbf16>
      %c3_51 = arith.constant 3 : index
      %c0_52 = arith.constant 0 : index
      %c0_53 = arith.constant 0 : index
      %51 = vector.load %arg3[%c3_51, %c0_52, %c0_53] : memref<16x8x128xbf16, #tpu.memory_space<vmem>>, vector<1x8x128xbf16>
      %52 = vector.shape_cast %51 : vector<1x8x128xbf16> to vector<8x128xbf16>
      %cst_54 = arith.constant dense<0.000000e+00> : vector<16x128xf32>
      %53 = tpu.matmul %50, %52, %cst_54 {dimension_numbers = #tpu.dot_dimension_numbers<[1], [0], [0], [1], [0, 0, 1, 1], [], []>} : vector<16x8xbf16>, vector<8x128xbf16>, vector<16x128xf32> -> vector<16x128xf32>
      %54 = arith.addf %49, %53 : vector<16x128xf32>
      %55 = vector.extract_strided_slice %21 {offsets = [0, 0], sizes = [16, 8], strides = [1, 1]} : vector<17x8xbf16> to vector<16x8xbf16>
      %c4 = arith.constant 4 : index
      %c0_55 = arith.constant 0 : index
      %c0_56 = arith.constant 0 : index
      %56 = vector.load %arg3[%c4, %c0_55, %c0_56] : memref<16x8x128xbf16, #tpu.memory_space<vmem>>, vector<1x8x128xbf16>
      %57 = vector.shape_cast %56 : vector<1x8x128xbf16> to vector<8x128xbf16>
      %cst_57 = arith.constant dense<0.000000e+00> : vector<16x128xf32>
      %58 = tpu.matmul %55, %57, %cst_57 {dimension_numbers = #tpu.dot_dimension_numbers<[1], [0], [0], [1], [0, 0, 1, 1], [], []>} : vector<16x8xbf16>, vector<8x128xbf16>, vector<16x128xf32> -> vector<16x128xf32>
      %59 = arith.addf %54, %58 : vector<16x128xf32>
      %60 = vector.extract_strided_slice %29 {offsets = [0, 0], sizes = [16, 8], strides = [1, 1]} : vector<17x8xbf16> to vector<16x8xbf16>
      %c5 = arith.constant 5 : index
      %c0_58 = arith.constant 0 : index
      %c0_59 = arith.constant 0 : index
      %61 = vector.load %arg3[%c5, %c0_58, %c0_59] : memref<16x8x128xbf16, #tpu.memory_space<vmem>>, vector<1x8x128xbf16>
      %62 = vector.shape_cast %61 : vector<1x8x128xbf16> to vector<8x128xbf16>
      %cst_60 = arith.constant dense<0.000000e+00> : vector<16x128xf32>
      %63 = tpu.matmul %60, %62, %cst_60 {dimension_numbers = #tpu.dot_dimension_numbers<[1], [0], [0], [1], [0, 0, 1, 1], [], []>} : vector<16x8xbf16>, vector<8x128xbf16>, vector<16x128xf32> -> vector<16x128xf32>
      %64 = arith.addf %59, %63 : vector<16x128xf32>
      %65 = vector.extract_strided_slice %21 {offsets = [1, 0], sizes = [16, 8], strides = [1, 1]} : vector<17x8xbf16> to vector<16x8xbf16>
      %c6 = arith.constant 6 : index
      %c0_61 = arith.constant 0 : index
      %c0_62 = arith.constant 0 : index
      %66 = vector.load %arg3[%c6, %c0_61, %c0_62] : memref<16x8x128xbf16, #tpu.memory_space<vmem>>, vector<1x8x128xbf16>
      %67 = vector.shape_cast %66 : vector<1x8x128xbf16> to vector<8x128xbf16>
      %cst_63 = arith.constant dense<0.000000e+00> : vector<16x128xf32>
      %68 = tpu.matmul %65, %67, %cst_63 {dimension_numbers = #tpu.dot_dimension_numbers<[1], [0], [0], [1], [0, 0, 1, 1], [], []>} : vector<16x8xbf16>, vector<8x128xbf16>, vector<16x128xf32> -> vector<16x128xf32>
      %69 = arith.addf %64, %68 : vector<16x128xf32>
      %70 = vector.extract_strided_slice %29 {offsets = [1, 0], sizes = [16, 8], strides = [1, 1]} : vector<17x8xbf16> to vector<16x8xbf16>
      %c7 = arith.constant 7 : index
      %c0_64 = arith.constant 0 : index
      %c0_65 = arith.constant 0 : index
      %71 = vector.load %arg3[%c7, %c0_64, %c0_65] : memref<16x8x128xbf16, #tpu.memory_space<vmem>>, vector<1x8x128xbf16>
      %72 = vector.shape_cast %71 : vector<1x8x128xbf16> to vector<8x128xbf16>
      %cst_66 = arith.constant dense<0.000000e+00> : vector<16x128xf32>
      %73 = tpu.matmul %70, %72, %cst_66 {dimension_numbers = #tpu.dot_dimension_numbers<[1], [0], [0], [1], [0, 0, 1, 1], [], []>} : vector<16x8xbf16>, vector<8x128xbf16>, vector<16x128xf32> -> vector<16x128xf32>
      %74 = arith.addf %69, %73 : vector<16x128xf32>
      %75 = vector.extract_strided_slice %9 {offsets = [0, 0], sizes = [16, 8], strides = [1, 1]} : vector<17x8xbf16> to vector<16x8xbf16>
      %c8 = arith.constant 8 : index
      %c0_67 = arith.constant 0 : index
      %c0_68 = arith.constant 0 : index
      %76 = vector.load %arg3[%c8, %c0_67, %c0_68] : memref<16x8x128xbf16, #tpu.memory_space<vmem>>, vector<1x8x128xbf16>
      %77 = vector.shape_cast %76 : vector<1x8x128xbf16> to vector<8x128xbf16>
      %cst_69 = arith.constant dense<0.000000e+00> : vector<16x128xf32>
      %78 = tpu.matmul %75, %77, %cst_69 {dimension_numbers = #tpu.dot_dimension_numbers<[1], [0], [0], [1], [0, 0, 1, 1], [], []>} : vector<16x8xbf16>, vector<8x128xbf16>, vector<16x128xf32> -> vector<16x128xf32>
      %79 = arith.addf %74, %78 : vector<16x128xf32>
      %80 = vector.extract_strided_slice %17 {offsets = [0, 0], sizes = [16, 8], strides = [1, 1]} : vector<17x8xbf16> to vector<16x8xbf16>
      %c9 = arith.constant 9 : index
      %c0_70 = arith.constant 0 : index
      %c0_71 = arith.constant 0 : index
      %81 = vector.load %arg3[%c9, %c0_70, %c0_71] : memref<16x8x128xbf16, #tpu.memory_space<vmem>>, vector<1x8x128xbf16>
      %82 = vector.shape_cast %81 : vector<1x8x128xbf16> to vector<8x128xbf16>
      %cst_72 = arith.constant dense<0.000000e+00> : vector<16x128xf32>
      %83 = tpu.matmul %80, %82, %cst_72 {dimension_numbers = #tpu.dot_dimension_numbers<[1], [0], [0], [1], [0, 0, 1, 1], [], []>} : vector<16x8xbf16>, vector<8x128xbf16>, vector<16x128xf32> -> vector<16x128xf32>
      %84 = arith.addf %79, %83 : vector<16x128xf32>
      %85 = vector.extract_strided_slice %9 {offsets = [1, 0], sizes = [16, 8], strides = [1, 1]} : vector<17x8xbf16> to vector<16x8xbf16>
      %c10 = arith.constant 10 : index
      %c0_73 = arith.constant 0 : index
      %c0_74 = arith.constant 0 : index
      %86 = vector.load %arg3[%c10, %c0_73, %c0_74] : memref<16x8x128xbf16, #tpu.memory_space<vmem>>, vector<1x8x128xbf16>
      %87 = vector.shape_cast %86 : vector<1x8x128xbf16> to vector<8x128xbf16>
      %cst_75 = arith.constant dense<0.000000e+00> : vector<16x128xf32>
      %88 = tpu.matmul %85, %87, %cst_75 {dimension_numbers = #tpu.dot_dimension_numbers<[1], [0], [0], [1], [0, 0, 1, 1], [], []>} : vector<16x8xbf16>, vector<8x128xbf16>, vector<16x128xf32> -> vector<16x128xf32>
      %89 = arith.addf %84, %88 : vector<16x128xf32>
      %90 = vector.extract_strided_slice %17 {offsets = [1, 0], sizes = [16, 8], strides = [1, 1]} : vector<17x8xbf16> to vector<16x8xbf16>
      %c11 = arith.constant 11 : index
      %c0_76 = arith.constant 0 : index
      %c0_77 = arith.constant 0 : index
      %91 = vector.load %arg3[%c11, %c0_76, %c0_77] : memref<16x8x128xbf16, #tpu.memory_space<vmem>>, vector<1x8x128xbf16>
      %92 = vector.shape_cast %91 : vector<1x8x128xbf16> to vector<8x128xbf16>
      %cst_78 = arith.constant dense<0.000000e+00> : vector<16x128xf32>
      %93 = tpu.matmul %90, %92, %cst_78 {dimension_numbers = #tpu.dot_dimension_numbers<[1], [0], [0], [1], [0, 0, 1, 1], [], []>} : vector<16x8xbf16>, vector<8x128xbf16>, vector<16x128xf32> -> vector<16x128xf32>
      %94 = arith.addf %89, %93 : vector<16x128xf32>
      %95 = vector.extract_strided_slice %25 {offsets = [0, 0], sizes = [16, 8], strides = [1, 1]} : vector<17x8xbf16> to vector<16x8xbf16>
      %c12 = arith.constant 12 : index
      %c0_79 = arith.constant 0 : index
      %c0_80 = arith.constant 0 : index
      %96 = vector.load %arg3[%c12, %c0_79, %c0_80] : memref<16x8x128xbf16, #tpu.memory_space<vmem>>, vector<1x8x128xbf16>
      %97 = vector.shape_cast %96 : vector<1x8x128xbf16> to vector<8x128xbf16>
      %cst_81 = arith.constant dense<0.000000e+00> : vector<16x128xf32>
      %98 = tpu.matmul %95, %97, %cst_81 {dimension_numbers = #tpu.dot_dimension_numbers<[1], [0], [0], [1], [0, 0, 1, 1], [], []>} : vector<16x8xbf16>, vector<8x128xbf16>, vector<16x128xf32> -> vector<16x128xf32>
      %99 = arith.addf %94, %98 : vector<16x128xf32>
      %100 = vector.extract_strided_slice %33 {offsets = [0, 0], sizes = [16, 8], strides = [1, 1]} : vector<17x8xbf16> to vector<16x8xbf16>
      %c13 = arith.constant 13 : index
      %c0_82 = arith.constant 0 : index
      %c0_83 = arith.constant 0 : index
      %101 = vector.load %arg3[%c13, %c0_82, %c0_83] : memref<16x8x128xbf16, #tpu.memory_space<vmem>>, vector<1x8x128xbf16>
      %102 = vector.shape_cast %101 : vector<1x8x128xbf16> to vector<8x128xbf16>
      %cst_84 = arith.constant dense<0.000000e+00> : vector<16x128xf32>
      %103 = tpu.matmul %100, %102, %cst_84 {dimension_numbers = #tpu.dot_dimension_numbers<[1], [0], [0], [1], [0, 0, 1, 1], [], []>} : vector<16x8xbf16>, vector<8x128xbf16>, vector<16x128xf32> -> vector<16x128xf32>
      %104 = arith.addf %99, %103 : vector<16x128xf32>
      %105 = vector.extract_strided_slice %25 {offsets = [1, 0], sizes = [16, 8], strides = [1, 1]} : vector<17x8xbf16> to vector<16x8xbf16>
      %c14 = arith.constant 14 : index
      %c0_85 = arith.constant 0 : index
      %c0_86 = arith.constant 0 : index
      %106 = vector.load %arg3[%c14, %c0_85, %c0_86] : memref<16x8x128xbf16, #tpu.memory_space<vmem>>, vector<1x8x128xbf16>
      %107 = vector.shape_cast %106 : vector<1x8x128xbf16> to vector<8x128xbf16>
      %cst_87 = arith.constant dense<0.000000e+00> : vector<16x128xf32>
      %108 = tpu.matmul %105, %107, %cst_87 {dimension_numbers = #tpu.dot_dimension_numbers<[1], [0], [0], [1], [0, 0, 1, 1], [], []>} : vector<16x8xbf16>, vector<8x128xbf16>, vector<16x128xf32> -> vector<16x128xf32>
      %109 = arith.addf %104, %108 : vector<16x128xf32>
      %110 = vector.extract_strided_slice %33 {offsets = [1, 0], sizes = [16, 8], strides = [1, 1]} : vector<17x8xbf16> to vector<16x8xbf16>
      %c15 = arith.constant 15 : index
      %c0_88 = arith.constant 0 : index
      %c0_89 = arith.constant 0 : index
      %111 = vector.load %arg3[%c15, %c0_88, %c0_89] : memref<16x8x128xbf16, #tpu.memory_space<vmem>>, vector<1x8x128xbf16>
      %112 = vector.shape_cast %111 : vector<1x8x128xbf16> to vector<8x128xbf16>
      %cst_90 = arith.constant dense<0.000000e+00> : vector<16x128xf32>
      %113 = tpu.matmul %110, %112, %cst_90 {dimension_numbers = #tpu.dot_dimension_numbers<[1], [0], [0], [1], [0, 0, 1, 1], [], []>} : vector<16x8xbf16>, vector<8x128xbf16>, vector<16x128xf32> -> vector<16x128xf32>
      %114 = arith.addf %109, %113 : vector<16x128xf32>
      %115 = vector.broadcast %0 : vector<1x128xf32> to vector<16x128xf32>
      %116 = arith.addf %114, %115 : vector<16x128xf32>
      %cst_91 = arith.constant 0.000000e+00 : f32
      %117 = vector.broadcast %cst_91 : f32 to vector<16x128xf32>
      %118 = arith.cmpf oge, %116, %117 : vector<16x128xf32>
      %cst_92 = arith.constant 2.000000e-01 : f32
      %119 = vector.broadcast %cst_92 : f32 to vector<16x128xf32>
      %120 = arith.mulf %119, %116 : vector<16x128xf32>
      %121 = arith.select %118, %116, %120 : vector<16x128xi1>, vector<16x128xf32>
      %122 = arith.truncf %121 : vector<16x128xf32> to vector<16x128xbf16>
      %c0_93 = arith.constant 0 : index
      %123 = arith.index_cast %arg8 : i32 to index
      %c0_94 = arith.constant 0 : index
      %c0_95 = arith.constant 0 : index
      %124 = vector.load %arg7[%c0_93, %123, %c0_94, %c0_95] : memref<1x16x16x128xbf16, #tpu.memory_space<vmem>>, vector<1x1x16x128xbf16>
      %125 = vector.shape_cast %124 : vector<1x1x16x128xbf16> to vector<16x128xbf16>
      %126 = vector.shape_cast %122 : vector<16x128xbf16> to vector<1x1x16x128xbf16>
      tpu.vector_store %arg7[%c0_93, %123, %c0_94, %c0_95], %126 {strides = array<i32>} : memref<1x16x16x128xbf16, #tpu.memory_space<vmem>>, vector<1x1x16x128xbf16>,
    }
    %c16_i32_1 = arith.constant 16 : i32
    return
  }
  func.func @transform_0(%arg0: i32, %arg1: i32) -> (i32, i32, i32, i32, i32) {
    %c0_i32 = arith.constant 0 : i32
    %c0_i32_0 = arith.constant 0 : i32
    %c0_i32_1 = arith.constant 0 : i32
    %c0_i32_2 = arith.constant 0 : i32
    %c0_i32_3 = arith.constant 0 : i32
    return %arg0, %c0_i32, %c0_i32_0, %c0_i32_1, %c0_i32_2 : i32, i32, i32, i32, i32
  }
  func.func @transform_1(%arg0: i32, %arg1: i32) -> (i32, i32, i32) {
    %c0_i32 = arith.constant 0 : i32
    %c0_i32_0 = arith.constant 0 : i32
    %c0_i32_1 = arith.constant 0 : i32
    return %c0_i32, %c0_i32_0, %arg1 : i32, i32, i32
  }
  func.func @transform_2(%arg0: i32, %arg1: i32) -> (i32, i32) {
    %c0_i32 = arith.constant 0 : i32
    %c0_i32_0 = arith.constant 0 : i32
    return %c0_i32, %arg1 : i32, i32
  }
  func.func @transform_3(%arg0: i32, %arg1: i32) -> (i32, i32) {
    %c0_i32 = arith.constant 0 : i32
    %c0_i32_0 = arith.constant 0 : i32
    %c0_i32_1 = arith.constant 0 : i32
    return %c0_i32, %c0_i32_0 : i32, i32
  }
  func.func @transform_4(%arg0: i32, %arg1: i32) -> (i32, i32) {
    %c0_i32 = arith.constant 0 : i32
    %c0_i32_0 = arith.constant 0 : i32
    %c0_i32_1 = arith.constant 0 : i32
    return %c0_i32, %c0_i32_0 : i32, i32
  }
  func.func @transform_5(%arg0: i32, %arg1: i32) -> (i32, i32, i32, i32) {
    %c0_i32 = arith.constant 0 : i32
    %c0_i32_0 = arith.constant 0 : i32
    %c0_i32_1 = arith.constant 0 : i32
    return %arg0, %c0_i32, %c0_i32_0, %arg1 : i32, i32, i32, i32
  }
}

</mosaic_0001>

<llo_original>
// kernel: tpu_custom_call.1
$region0: #{tpu_custom_call.1}
  #allocation0 [shape = 'u32[]', space=smem, size = 0x4, offset = 0x4, fixed_abs, tag = 'smem constant byte address 0x4 - core index']
  #allocation1 [shape = 'u32[72,128]{1,0:T(1,128)}', space=vmem, size = 0x9000, scoped, tag = 'internal scratch']
  %s0 = inlined_call_operand.vmem [shape: bf16[2,4,17,17,8], index: 0, kind: input, shape index: {}]
  %s1 = inlined_call_operand.vmem [shape: bf16[16,8,128], index: 1, kind: input, shape index: {}]
  %s2 = inlined_call_operand.vmem [shape: f32[1,128], index: 2, kind: input, shape index: {}]
  %s3 = inlined_call_operand.vmem [shape: f32[1,8], index: 3, kind: input, shape index: {}]
  %s4 = inlined_call_operand.vmem [shape: f32[1,8], index: 4, kind: input, shape index: {}]
  %s5 = inlined_call_operand.hbm [shape: bf16[2,16,16,128], index: 5, kind: output, shape index: {}]
  %s6 = sld [smem:[#allocation0]]
  $region60: #{tpu_custom_call.1} parent=0
    _
  %s8 = ssub.s32 1, %s6
  %s9 = scalar_select 0, %s8, %s6
  $region1: #{tpu_custom_call.1} parent=0
    #allocation2 [shape = 'u8[131072]{0}', space=vmem, size = 0x20000, scoped, tag = 'output window, operand 0']
    #allocation3 [shape = 's32[2]{0}', space=sflag, size = 0x8, scoped, tag = 'scoped memory for tpu_custom_call.1']
    %10 = vsyncpa [#allocation3], 0
    %s11 = scalar_lea.sflag [#allocation3], 1
    %12 = vsyncpa %s11, 0
    loop: start=0, step=1, limit=4
    $region2: #{tpu_custom_call.1} parent=1 // loop_pre_header
      _
    $region3: #{tpu_custom_call.1} parent=1 // loop_header
      %s14 = sphi 0, %s18
      %p15 = scmp.ge.s32.totalorder %s14, 4
      %s21 = sphi 0, %s33
      %s22 = sphi 0, %s29
      %s23 = sphi 0, %s21
      %s24 = sphi 0, %s22
      %s25 = sphi 0, %s23
      %s26 = sphi 0, %s24
      %s36 = sphi 0, %s38
      %s39 = sphi 0, %s36
      %s40 = sphi 0, %s39
      %s56 = sphi 0, %s40
      %s62 = sphi 0, %s64
      %s65 = sphi 0, %s62
      %s66 = sphi 0, %s65
      %s82 = sphi 0, %s66
      %s88 = sphi 0, %s90
      %s91 = sphi 0, %s88
      %s92 = sphi 0, %s91
      %s108 = sphi 0, %s92
      %s112 = sphi 0, %s112
      %s114 = sphi 0, %s112
      %s115 = sphi 0, %s114
      %s129 = sphi 0, %s115
      %s133 = sphi 0, %s133
      %s135 = sphi 0, %s133
      %s136 = sphi 0, %s135
      %s150 = sphi 0, %s136
      %s158 = sphi 0, %s160
      %s161 = sphi 0, %s158
      %s162 = sphi 0, %s161
      %s178 = sphi 0, %s162
    $region4: #{tpu_custom_call.1} parent=1 // loop_header_branch
      %17 = sbr.rel (%p15) target = $region8
    $region5: #{tpu_custom_call.1} parent=1 // loop_body
      %s19 = ssub.s32 %s14, 1
      %s20 = ssub.s32 %s14, 2
      %s27 = sadd.s32 1, %s22
      %p28 = scmp.ge.s32.totalorder %s27, 1
      %s29 = scalar_select %p28, 0, %s27
      %s30 = sadd.s32 1, %s21
      %s31 = scalar_select %p28, %s30, %s21
      %p32 = scmp.ge.s32.totalorder %s31, 2
      %s33 = scalar_select %p32, 0, %s31
      %s34 = ssub.s32 %s21, %s33
      %p35 = scmp.eq.s32.totalorder %s34, 0
      %s37 = sadd.s32 %s36, 1
      %s38 = scalar_select %p35, %s36, %s37
      %p41 = pneg %p35
      %p42 = scmp.eq.s32.totalorder %s14, 1
      %p43 = por %p41, %p42
      %p44 = scmp.ne.s32.totalorder %s36, %s39
      %p45 = scmp.eq.s32.totalorder %s14, 0
      %p46 = por %p44, %p45
      %p47 = scmp.ne.s32.totalorder %s36, %s39
      %p48 = scmp.eq.s32.totalorder %s19, 1
      %p49 = por %p47, %p48
      %p50 = scmp.ne.s32.totalorder %s39, %s40
      %p51 = scmp.eq.s32.totalorder %s19, 0
      %p52 = por %p50, %p51
      %p53 = scmp.ne.s32.totalorder %s39, %s40
      %p54 = scmp.eq.s32.totalorder %s20, 1
      %p55 = por %p53, %p54
      %p57 = scmp.ne.s32.totalorder %s40, %s56
      %p58 = scmp.eq.s32.totalorder %s20, 0
      %p59 = por %p57, %p58
      %s60 = ssub.s32 %s22, %s29
      %p61 = scmp.eq.s32.totalorder %s60, 0
      %s63 = sadd.s32 %s62, 1
      %s64 = scalar_select %p61, %s62, %s63
      %p67 = pneg %p61
      %p68 = scmp.eq.s32.totalorder %s14, 1
      %p69 = por %p67, %p68
      %p70 = scmp.ne.s32.totalorder %s62, %s65
      %p71 = scmp.eq.s32.totalorder %s14, 0
      %p72 = por %p70, %p71
      %p73 = scmp.ne.s32.totalorder %s62, %s65
      %p74 = scmp.eq.s32.totalorder %s19, 1
      %p75 = por %p73, %p74
      %p76 = scmp.ne.s32.totalorder %s65, %s66
      %p77 = scmp.eq.s32.totalorder %s19, 0
      %p78 = por %p76, %p77
      %p79 = scmp.ne.s32.totalorder %s65, %s66
      %p80 = scmp.eq.s32.totalorder %s20, 1
      %p81 = por %p79, %p80
      %p83 = scmp.ne.s32.totalorder %s66, %s82
      %p84 = scmp.eq.s32.totalorder %s20, 0
      %p85 = por %p83, %p84
      %s86 = ssub.s32 %s22, %s29
      %p87 = scmp.eq.s32.totalorder %s86, 0
      %s89 = sadd.s32 %s88, 1
      %s90 = scalar_select %p87, %s88, %s89
      %p93 = pneg %p87
      %p94 = scmp.eq.s32.totalorder %s14, 1
      %p95 = por %p93, %p94
      %p96 = scmp.ne.s32.totalorder %s88, %s91
      %p97 = scmp.eq.s32.totalorder %s14, 0
      %p98 = por %p96, %p97
      %p99 = scmp.ne.s32.totalorder %s88, %s91
      %p100 = scmp.eq.s32.totalorder %s19, 1
      %p101 = por %p99, %p100
      %p102 = scmp.ne.s32.totalorder %s91, %s92
      %p103 = scmp.eq.s32.totalorder %s19, 0
      %p104 = por %p102, %p103
      %p105 = scmp.ne.s32.totalorder %s91, %s92
      %p106 = scmp.eq.s32.totalorder %s20, 1
      %p107 = por %p105, %p106
      %p109 = scmp.ne.s32.totalorder %s92, %s108
      %p110 = scmp.eq.s32.totalorder %s20, 0
      %p111 = por %p109, %p110
      %s113 = sadd.s32 %s112, 1
      %p116 = scmp.eq.s32.totalorder %s14, 1
      %p117 = scmp.ne.s32.totalorder %s112, %s114
      %p118 = scmp.eq.s32.totalorder %s14, 0
      %p119 = por %p117, %p118
      %p120 = scmp.ne.s32.totalorder %s112, %s114
      %p121 = scmp.eq.s32.totalorder %s19, 1
      %p122 = por %p120, %p121
      %p123 = scmp.ne.s32.totalorder %s114, %s115
      %p124 = scmp.eq.s32.totalorder %s19, 0
      %p125 = por %p123, %p124
      %p126 = scmp.ne.s32.totalorder %s114, %s115
      %p127 = scmp.eq.s32.totalorder %s20, 1
      %p128 = por %p126, %p127
      %p130 = scmp.ne.s32.totalorder %s115, %s129
      %p131 = scmp.eq.s32.totalorder %s20, 0
      %p132 = por %p130, %p131
      %s134 = sadd.s32 %s133, 1
      %p137 = scmp.eq.s32.totalorder %s14, 1
      %p138 = scmp.ne.s32.totalorder %s133, %s135
      %p139 = scmp.eq.s32.totalorder %s14, 0
      %p140 = por %p138, %p139
      %p141 = scmp.ne.s32.totalorder %s133, %s135
      %p142 = scmp.eq.s32.totalorder %s19, 1
      %p143 = por %p141, %p142
      %p144 = scmp.ne.s32.totalorder %s135, %s136
      %p145 = scmp.eq.s32.totalorder %s19, 0
      %p146 = por %p144, %p145
      %p147 = scmp.ne.s32.totalorder %s135, %s136
      %p148 = scmp.eq.s32.totalorder %s20, 1
      %p149 = por %p147, %p148
      %p151 = scmp.ne.s32.totalorder %s136, %s150
      %p152 = scmp.eq.s32.totalorder %s20, 0
      %p153 = por %p151, %p152
      %s154 = ssub.s32 %s21, %s33
      %s155 = ssub.s32 %s22, %s29
      %s156 = sor.u32 %s154, %s155
      %p157 = scmp.eq.s32.totalorder %s156, 0
      %s159 = sadd.s32 %s158, 1
      %s160 = scalar_select %p157, %s158, %s159
      %p163 = pneg %p157
      %p164 = scmp.eq.s32.totalorder %s14, 1
      %p165 = por %p163, %p164
      %p166 = scmp.ne.s32.totalorder %s158, %s161
      %p167 = scmp.eq.s32.totalorder %s14, 0
      %p168 = por %p166, %p167
      %p169 = scmp.ne.s32.totalorder %s158, %s161
      %p170 = scmp.eq.s32.totalorder %s19, 1
      %p171 = por %p169, %p170
      %p172 = scmp.ne.s32.totalorder %s161, %s162
      %p173 = scmp.eq.s32.totalorder %s19, 0
      %p174 = por %p172, %p173
      %p175 = scmp.ne.s32.totalorder %s161, %s162
      %p176 = scmp.eq.s32.totalorder %s20, 1
      %p177 = por %p175, %p176
      %p179 = scmp.ne.s32.totalorder %s162, %s178
      %p180 = scmp.eq.s32.totalorder %s20, 0
      %p181 = por %p179, %p180
      %p182 = scmp.le.s32.totalorder 1, %s14
      %p183 = scmp.lt.s32.totalorder %s14, 3
      %p184 = pnand %p182, %p183
      %p185 = pneg %p184
      // Predicated region
      $region9: #{tpu_custom_call.1} parent=5 // pred_check
        _
      $region10: #{tpu_custom_call.1} parent=5 // pred_check_branch
        %187 = sbr.rel (%p184) target = $region12
      $region11: #{tpu_custom_call.1} parent=5 // pred_region
        %s188 = ssub.s32 %s14, 1
        // Predicated region
        $region13: #{tpu_custom_call.1} parent=11 // pred_check
          %p189 = pneg %p78
        $region14: #{tpu_custom_call.1} parent=11 // pred_check_branch
          %191 = sbr.rel (%p189) target = $region16
        $region15: #{tpu_custom_call.1} parent=11 // pred_region
          %p192 = scmp.lt.s32.totalorder %s24, 0
          %s193 = scalar_select %p192, %s24, 0
          %s194 = smul.addr %s193, 4
          %s195 = scalar_lea.vmem %s1, %s194
        $region16: #{tpu_custom_call.1} parent=11 // pred_fallthru
          _
        // Predicated region
        $region17: #{tpu_custom_call.1} parent=11 // pred_check
          %p196 = pneg %p104
        $region18: #{tpu_custom_call.1} parent=11 // pred_check_branch
          %198 = sbr.rel (%p196) target = $region20
        $region19: #{tpu_custom_call.1} parent=11 // pred_region
          %p199 = scmp.lt.s32.totalorder %s24, 0
          %s200 = scalar_select %p199, %s24, 0
          %s201 = scalar_lea.vmem %s2, %s200
        $region20: #{tpu_custom_call.1} parent=11 // pred_fallthru
          _
        // Predicated region
        $region21: #{tpu_custom_call.1} parent=11 // pred_check
          %p202 = pneg %p125
        $region22: #{tpu_custom_call.1} parent=11 // pred_check_branch
          %204 = sbr.rel (%p202) target = $region24
        $region23: #{tpu_custom_call.1} parent=11 // pred_region
          _
        $region24: #{tpu_custom_call.1} parent=11 // pred_fallthru
          _
        // Predicated region
        $region25: #{tpu_custom_call.1} parent=11 // pred_check
          %p205 = pneg %p146
        $region26: #{tpu_custom_call.1} parent=11 // pred_check_branch
          %207 = sbr.rel (%p205) target = $region28
        $region27: #{tpu_custom_call.1} parent=11 // pred_region
          _
        $region28: #{tpu_custom_call.1} parent=11 // pred_fallthru
          _
      $region12: #{tpu_custom_call.1} parent=5 // pred_fallthru
        _
      %p208 = scmp.lt.s32.totalorder %s14, 2
      // Predicated region
      $region29: #{tpu_custom_call.1} parent=5 // pred_check
        %p209 = pneg %p208
      $region30: #{tpu_custom_call.1} parent=5 // pred_check_branch
        %211 = sbr.rel (%p209) target = $region32
      $region31: #{tpu_custom_call.1} parent=5 // pred_region
        // Predicated region
        $region33: #{tpu_custom_call.1} parent=31 // pred_check
          %p212 = pneg %p46
        $region34: #{tpu_custom_call.1} parent=31 // pred_check_branch
          %214 = sbr.rel (%p212) target = $region36
        $region35: #{tpu_custom_call.1} parent=31 // pred_region
          %p215 = scmp.lt.s32.totalorder %s21, 1
          %s216 = scalar_select %p215, %s21, 1
          %s217 = smul.addr %s216, 204
          %s218 = smul.addr %s217, 4
          %s219 = scalar_lea.vmem %s0, %s218
        $region36: #{tpu_custom_call.1} parent=31 // pred_fallthru
          _
      $region32: #{tpu_custom_call.1} parent=5 // pred_fallthru
        _
      %p220 = scmp.le.s32.totalorder 1, %s14
      %p221 = scmp.lt.s32.totalorder %s14, 3
      %p222 = pnand %p220, %p221
      %p223 = pneg %p222
      // Predicated region
      $region37: #{tpu_custom_call.1} parent=5 // pred_check
        _
      $region38: #{tpu_custom_call.1} parent=5 // pred_check_branch
        %225 = sbr.rel (%p222) target = $region40
      $region39: #{tpu_custom_call.1} parent=5 // pred_region
        %s226 = ssub.s32 %s14, 1
        %p227 = scmp.lt.s32.totalorder %s23, 1
        %s228 = scalar_select %p227, %s23, 1
        %s229 = smul.addr %s228, 204
        %s230 = smul.addr %s229, 4
        %s231 = scalar_lea.vmem %s0, %s230
        %p232 = pneg %p52
        %p233 = pneg %p49
        %p234 = scmp.lt.s32.totalorder %s24, 0
        %s235 = scalar_select %p234, %s24, 0
        %s236 = smul.addr %s235, 4
        %s237 = scalar_lea.vmem %s1, %s236
        %p238 = pneg %p78
        %p239 = pneg %p75
        %p240 = scmp.lt.s32.totalorder %s24, 0
        %s241 = scalar_select %p240, %s24, 0
        %s242 = scalar_lea.vmem %s2, %s241
        %p243 = pneg %p104
        %p244 = pneg %p101
        %p245 = pneg %p125
        %p246 = pneg %p122
        %p247 = pneg %p146
        %p248 = pneg %p143
        %p249 = pneg %p174
        %p250 = pneg %p171
        %s251 = sand.u32 %s161, 1
        %s252 = scalar_lea.sflag [#allocation3], %s251
        %s253 = sand.u32 %s161, 1
        %s254 = smul.addr %s253, 128
        %s255 = scalar_lea.vmem [#allocation2], %s254
        %p256 = scmp.lt.s32.totalorder %s23, 1
        %s257 = scalar_select %p256, %s23, 1
        %s258 = smul.addr %s257, 204
        %s259 = smul.addr %s258, 4
        %s260 = scalar_lea.vmem %s0, %s259
        %p261 = scmp.lt.s32.totalorder %s24, 0
        %s262 = scalar_select %p261, %s24, 0
        %s263 = smul.addr %s262, 4
        %s264 = scalar_lea.vmem %s1, %s263
        %p265 = scmp.lt.s32.totalorder %s24, 0
        %s266 = scalar_select %p265, %s24, 0
        %s267 = scalar_lea.vmem %s2, %s266
        %v269 = vld [vmem:[%s267] sm:$0x1]
        loop: start=0, step=1, limit=16
        $region41: #{tpu_custom_call.1} parent=39 // loop_pre_header
          _
        $region42: #{tpu_custom_call.1} parent=39 // loop_header
          %s271 = sphi 0, %s275
          %p272 = scmp.ge.s32.totalorder %s271, 16
        $region43: #{tpu_custom_call.1} parent=39 // loop_header_branch
          %274 = sbr.rel (%p272) target = $region47
        $region44: #{tpu_custom_call.1} parent=39 // loop_body
          %s276 = smul.u32 %s271, 3
          %s277 = smul.addr %s276, 4
          %s278 = scalar_lea.vmem %s260, %s277
          %v279 = vld [vmem:[%s278] sm:$0xf]
          %v280 = vld [vmem:[%s278 + $0x4] sm:$0xf]
          %v281 = vld [vmem:[%s278 + $0x8] sm:$0x1]
          %s282 = sadd.s32 %s271, 1
          %s283 = smul.u32 %s282, 3
          %s284 = smul.addr %s283, 4
          %s285 = scalar_lea.vmem %s260, %s284
          %v286 = vld [vmem:[%s285] sm:$0xf]
          %v287 = vld [vmem:[%s285 + $0x4] sm:$0xf]
          %v288 = vld [vmem:[%s285 + $0x8] sm:$0x1]
          %s289 = sadd.s32 %s276, 51
          %s290 = smul.addr %s289, 4
          %s291 = scalar_lea.vmem %s260, %s290
          %v292 = vld [vmem:[%s291] sm:$0xf]
          %v293 = vld [vmem:[%s291 + $0x4] sm:$0xf]
          %v294 = vld [vmem:[%s291 + $0x8] sm:$0x1]
          %s295 = sadd.s32 %s283, 51
          %s296 = smul.addr %s295, 4
          %s297 = scalar_lea.vmem %s260, %s296
          %v298 = vld [vmem:[%s297] sm:$0xf]
          %v299 = vld [vmem:[%s297 + $0x4] sm:$0xf]
          %v300 = vld [vmem:[%s297 + $0x8] sm:$0x1]
          %s301 = sadd.s32 %s276, 102
          %s302 = smul.addr %s301, 4
          %s303 = scalar_lea.vmem %s260, %s302
          %v304 = vld [vmem:[%s303] sm:$0xf]
          %v305 = vld [vmem:[%s303 + $0x4] sm:$0xf]
          %v306 = vld [vmem:[%s303 + $0x8] sm:$0x1]
          %s307 = sadd.s32 %s283, 102
          %s308 = smul.addr %s307, 4
          %s309 = scalar_lea.vmem %s260, %s308
          %v310 = vld [vmem:[%s309] sm:$0xf]
          %v311 = vld [vmem:[%s309 + $0x4] sm:$0xf]
          %v312 = vld [vmem:[%s309 + $0x8] sm:$0x1]
          %s313 = sadd.s32 %s276, 153
          %s314 = smul.addr %s313, 4
          %s315 = scalar_lea.vmem %s260, %s314
          %v316 = vld [vmem:[%s315] sm:$0xf]
          %v317 = vld [vmem:[%s315 + $0x4] sm:$0xf]
          %v318 = vld [vmem:[%s315 + $0x8] sm:$0x1]
          %s319 = sadd.s32 %s283, 153
          %s320 = smul.addr %s319, 4
          %s321 = scalar_lea.vmem %s260, %s320
          %v322 = vld [vmem:[%s321] sm:$0xf]
          %v323 = vld [vmem:[%s321 + $0x4] sm:$0xf]
          %v324 = vld [vmem:[%s321 + $0x8] sm:$0x1]
          %v325 = vld [vmem:[%s264] sm:$0xf]
          %s326 = scalar_lea.vmem %s264, 4
          %v327 = vld [vmem:[%s326] sm:$0xf]
          %v330 = vunpack.c.l.b16 %v292
          %v331 = vunpack.c.l.b16 %v293
          %v332 = vpack.c.b16 %v331, %v330
          %vm333 = vcmask 64512
          %v335 = vsel %vm333, %v332, 0
          %vm337 = vcmask 1043456
          %v339 = vsel %vm337, %v327, 0
          %341 = vmatpush.bf16.msra.mxu0 0
          %342 = vmatpush.bf16.msra.mxu0 0
          %343 = vmatpush.bf16.msra.mxu0 0
          %344 = vmatpush.bf16.msra.mxu0 0
          %345 = vmatpush.bf16.msra.mxu0 0
          %346 = vmatpush.bf16.msra.mxu0 0
          %347 = vmatpush.bf16.msra.mxu0 0
          %348 = vmatpush.bf16.msra.mxu0 %v339
          %349 = vmatmul.bf16.gmra.mxu0 %v335
          %v350 = vpop.f32.mrf.mxu0
          %v351 = vadd.f32 0.0, %v350
          %v352 = vpop.f32.mrf.mxu0
          %v353 = vadd.f32 0.0, %v352
          %354 = vdwg.mxu0
          %v357 = vunpack.c.l.b16 %v279
          %v358 = vunpack.c.l.b16 %v280
          %v359 = vpack.c.b16 %v358, %v357
          %v361 = vsel %vm333, %v359, 0
          %v364 = vsel %vm337, %v325, 0
          %366 = vmatpush.bf16.msra.mxu0 0
          %367 = vmatpush.bf16.msra.mxu0 0
          %368 = vmatpush.bf16.msra.mxu0 0
          %369 = vmatpush.bf16.msra.mxu0 0
          %370 = vmatpush.bf16.msra.mxu0 0
          %371 = vmatpush.bf16.msra.mxu0 0
          %372 = vmatpush.bf16.msra.mxu0 0
          %373 = vmatpush.bf16.msra.mxu0 %v364
          %374 = vmatmul.bf16.gmra.mxu0 %v361
          %v375 = vpop.f32.mrf.mxu0
          %v376 = vadd.f32 %v351, %v375
          %v377 = vpop.f32.mrf.mxu0
          %v378 = vadd.f32 %v353, %v377
          %379 = vdwg.mxu0
          %s380 = scalar_lea.vmem %s264, 8
          %v381 = vld [vmem:[%s380] sm:$0xf]
          %v383 = vunpack.c.l.b16 %v281
          %v384 = vpack.c.b16 %v383, %v383
          %vm385 = vsmask.f32 7424
          %v386 = vshrl.u32 %v359, 16
          %v388 = vshll.u32 %v359, 16
          %v390 = vrot.slane %v388, 1
          %v391 = vor.u32 %v386, %v390
          %v393 = vshll.u32 %v384, 16
          %v395 = vrot.slane %v393, 1
          %v396 = vsel %vm385, %v391, %v395
          %v398 = vsel %vm333, %v396, 0
          %v401 = vsel %vm337, %v381, 0
          %403 = vmatpush.bf16.msra.mxu0 0
          %404 = vmatpush.bf16.msra.mxu0 0
          %405 = vmatpush.bf16.msra.mxu0 0
          %406 = vmatpush.bf16.msra.mxu0 0
          %407 = vmatpush.bf16.msra.mxu0 0
          %408 = vmatpush.bf16.msra.mxu0 0
          %409 = vmatpush.bf16.msra.mxu0 0
          %410 = vmatpush.bf16.msra.mxu0 %v401
          %411 = vmatmul.bf16.gmra.mxu0 %v398
          %v412 = vpop.f32.mrf.mxu0
          %v413 = vadd.f32 0.0, %v412
          %v414 = vpop.f32.mrf.mxu0
          %v415 = vadd.f32 0.0, %v414
          %416 = vdwg.mxu0
          %v417 = vadd.f32 %v376, %v413
          %v418 = vadd.f32 %v378, %v415
          %s419 = scalar_lea.vmem %s264, 12
          %v420 = vld [vmem:[%s419] sm:$0xf]
          %v422 = vunpack.c.l.b16 %v294
          %v423 = vpack.c.b16 %v422, %v422
          %v424 = vshrl.u32 %v332, 16
          %v426 = vshll.u32 %v332, 16
          %v428 = vrot.slane %v426, 1
          %v429 = vor.u32 %v424, %v428
          %v431 = vshll.u32 %v423, 16
          %v433 = vrot.slane %v431, 1
          %v434 = vsel %vm385, %v429, %v433
          %v436 = vsel %vm333, %v434, 0
          %v439 = vsel %vm337, %v420, 0
          %441 = vmatpush.bf16.msra.mxu0 0
          %442 = vmatpush.bf16.msra.mxu0 0
          %443 = vmatpush.bf16.msra.mxu0 0
          %444 = vmatpush.bf16.msra.mxu0 0
          %445 = vmatpush.bf16.msra.mxu0 0
          %446 = vmatpush.bf16.msra.mxu0 0
          %447 = vmatpush.bf16.msra.mxu0 0
          %448 = vmatpush.bf16.msra.mxu0 %v439
          %449 = vmatmul.bf16.gmra.mxu0 %v436
          %v450 = vpop.f32.mrf.mxu0
          %v451 = vadd.f32 0.0, %v450
          %v452 = vpop.f32.mrf.mxu0
          %v453 = vadd.f32 0.0, %v452
          %454 = vdwg.mxu0
          %v455 = vadd.f32 %v417, %v451
          %v456 = vadd.f32 %v418, %v453
          %s457 = scalar_lea.vmem %s264, 16
          %v458 = vld [vmem:[%s457] sm:$0xf]
          %v461 = vunpack.c.l.b16 %v304
          %v462 = vunpack.c.l.b16 %v305
          %v463 = vpack.c.b16 %v462, %v461
          %v465 = vsel %vm333, %v463, 0
          %v468 = vsel %vm337, %v458, 0
          %470 = vmatpush.bf16.msra.mxu0 0
          %471 = vmatpush.bf16.msra.mxu0 0
          %472 = vmatpush.bf16.msra.mxu0 0
          %473 = vmatpush.bf16.msra.mxu0 0
          %474 = vmatpush.bf16.msra.mxu0 0
          %475 = vmatpush.bf16.msra.mxu0 0
          %476 = vmatpush.bf16.msra.mxu0 0
          %477 = vmatpush.bf16.msra.mxu0 %v468
          %478 = vmatmul.bf16.gmra.mxu0 %v465
          %v479 = vpop.f32.mrf.mxu0
          %v480 = vadd.f32 0.0, %v479
          %v481 = vpop.f32.mrf.mxu0
          %v482 = vadd.f32 0.0, %v481
          %483 = vdwg.mxu0
          %v484 = vadd.f32 %v455, %v480
          %v485 = vadd.f32 %v456, %v482
          %s486 = scalar_lea.vmem %s264, 20
          %v487 = vld [vmem:[%s486] sm:$0xf]
          %v490 = vunpack.c.l.b16 %v316
          %v491 = vunpack.c.l.b16 %v317
          %v492 = vpack.c.b16 %v491, %v490
          %v494 = vsel %vm333, %v492, 0
          %v497 = vsel %vm337, %v487, 0
          %499 = vmatpush.bf16.msra.mxu0 0
          %500 = vmatpush.bf16.msra.mxu0 0
          %501 = vmatpush.bf16.msra.mxu0 0
          %502 = vmatpush.bf16.msra.mxu0 0
          %503 = vmatpush.bf16.msra.mxu0 0
          %504 = vmatpush.bf16.msra.mxu0 0
          %505 = vmatpush.bf16.msra.mxu0 0
          %506 = vmatpush.bf16.msra.mxu0 %v497
          %507 = vmatmul.bf16.gmra.mxu0 %v494
          %v508 = vpop.f32.mrf.mxu0
          %v509 = vadd.f32 0.0, %v508
          %v510 = vpop.f32.mrf.mxu0
          %v511 = vadd.f32 0.0, %v510
          %512 = vdwg.mxu0
          %v513 = vadd.f32 %v484, %v509
          %v514 = vadd.f32 %v485, %v511
          %s515 = scalar_lea.vmem %s264, 24
          %v516 = vld [vmem:[%s515] sm:$0xf]
          %v518 = vunpack.c.l.b16 %v306
          %v519 = vpack.c.b16 %v518, %v518
          %v520 = vshrl.u32 %v463, 16
          %v522 = vshll.u32 %v463, 16
          %v524 = vrot.slane %v522, 1
          %v525 = vor.u32 %v520, %v524
          %v527 = vshll.u32 %v519, 16
          %v529 = vrot.slane %v527, 1
          %v530 = vsel %vm385, %v525, %v529
          %v532 = vsel %vm333, %v530, 0
          %v535 = vsel %vm337, %v516, 0
          %537 = vmatpush.bf16.msra.mxu0 0
          %538 = vmatpush.bf16.msra.mxu0 0
          %539 = vmatpush.bf16.msra.mxu0 0
          %540 = vmatpush.bf16.msra.mxu0 0
          %541 = vmatpush.bf16.msra.mxu0 0
          %542 = vmatpush.bf16.msra.mxu0 0
          %543 = vmatpush.bf16.msra.mxu0 0
          %544 = vmatpush.bf16.msra.mxu0 %v535
          %545 = vmatmul.bf16.gmra.mxu0 %v532
          %v546 = vpop.f32.mrf.mxu0
          %v547 = vadd.f32 0.0, %v546
          %v548 = vpop.f32.mrf.mxu0
          %v549 = vadd.f32 0.0, %v548
          %550 = vdwg.mxu0
          %v551 = vadd.f32 %v513, %v547
          %v552 = vadd.f32 %v514, %v549
          %s553 = scalar_lea.vmem %s264, 28
          %v554 = vld [vmem:[%s553] sm:$0xf]
          %v556 = vunpack.c.l.b16 %v318
          %v557 = vpack.c.b16 %v556, %v556
          %v558 = vshrl.u32 %v492, 16
          %v560 = vshll.u32 %v492, 16
          %v562 = vrot.slane %v560, 1
          %v563 = vor.u32 %v558, %v562
          %v565 = vshll.u32 %v557, 16
          %v567 = vrot.slane %v565, 1
          %v568 = vsel %vm385, %v563, %v567
          %v570 = vsel %vm333, %v568, 0
          %v573 = vsel %vm337, %v554, 0
          %575 = vmatpush.bf16.msra.mxu0 0
          %576 = vmatpush.bf16.msra.mxu0 0
          %577 = vmatpush.bf16.msra.mxu0 0
          %578 = vmatpush.bf16.msra.mxu0 0
          %579 = vmatpush.bf16.msra.mxu0 0
          %580 = vmatpush.bf16.msra.mxu0 0
          %581 = vmatpush.bf16.msra.mxu0 0
          %582 = vmatpush.bf16.msra.mxu0 %v573
          %583 = vmatmul.bf16.gmra.mxu0 %v570
          %v584 = vpop.f32.mrf.mxu0
          %v585 = vadd.f32 0.0, %v584
          %v586 = vpop.f32.mrf.mxu0
          %v587 = vadd.f32 0.0, %v586
          %588 = vdwg.mxu0
          %v589 = vadd.f32 %v551, %v585
          %v590 = vadd.f32 %v552, %v587
          %s591 = scalar_lea.vmem %s264, 32
          %v592 = vld [vmem:[%s591] sm:$0xf]
          %v595 = vunpack.c.l.b16 %v286
          %v596 = vunpack.c.l.b16 %v287
          %v597 = vpack.c.b16 %v596, %v595
          %v599 = vsel %vm333, %v597, 0
          %v602 = vsel %vm337, %v592, 0
          %604 = vmatpush.bf16.msra.mxu0 0
          %605 = vmatpush.bf16.msra.mxu0 0
          %606 = vmatpush.bf16.msra.mxu0 0
          %607 = vmatpush.bf16.msra.mxu0 0
          %608 = vmatpush.bf16.msra.mxu0 0
          %609 = vmatpush.bf16.msra.mxu0 0
          %610 = vmatpush.bf16.msra.mxu0 0
          %611 = vmatpush.bf16.msra.mxu0 %v602
          %612 = vmatmul.bf16.gmra.mxu0 %v599
          %v613 = vpop.f32.mrf.mxu0
          %v614 = vadd.f32 0.0, %v613
          %v615 = vpop.f32.mrf.mxu0
          %v616 = vadd.f32 0.0, %v615
          %617 = vdwg.mxu0
          %v618 = vadd.f32 %v589, %v614
          %v619 = vadd.f32 %v590, %v616
          %s620 = scalar_lea.vmem %s264, 36
          %v621 = vld [vmem:[%s620] sm:$0xf]
          %v624 = vunpack.c.l.b16 %v298
          %v625 = vunpack.c.l.b16 %v299
          %v626 = vpack.c.b16 %v625, %v624
          %v628 = vsel %vm333, %v626, 0
          %v631 = vsel %vm337, %v621, 0
          %633 = vmatpush.bf16.msra.mxu0 0
          %634 = vmatpush.bf16.msra.mxu0 0
          %635 = vmatpush.bf16.msra.mxu0 0
          %636 = vmatpush.bf16.msra.mxu0 0
          %637 = vmatpush.bf16.msra.mxu0 0
          %638 = vmatpush.bf16.msra.mxu0 0
          %639 = vmatpush.bf16.msra.mxu0 0
          %640 = vmatpush.bf16.msra.mxu0 %v631
          %641 = vmatmul.bf16.gmra.mxu0 %v628
          %v642 = vpop.f32.mrf.mxu0
          %v643 = vadd.f32 0.0, %v642
          %v644 = vpop.f32.mrf.mxu0
          %v645 = vadd.f32 0.0, %v644
          %646 = vdwg.mxu0
          %v647 = vadd.f32 %v618, %v643
          %v648 = vadd.f32 %v619, %v645
          %s649 = scalar_lea.vmem %s264, 40
          %v650 = vld [vmem:[%s649] sm:$0xf]
          %v652 = vunpack.c.l.b16 %v288
          %v653 = vpack.c.b16 %v652, %v652
          %v654 = vshrl.u32 %v597, 16
          %v656 = vshll.u32 %v597, 16
          %v658 = vrot.slane %v656, 1
          %v659 = vor.u32 %v654, %v658
          %v661 = vshll.u32 %v653, 16
          %v663 = vrot.slane %v661, 1
          %v664 = vsel %vm385, %v659, %v663
          %v666 = vsel %vm333, %v664, 0
          %v669 = vsel %vm337, %v650, 0
          %671 = vmatpush.bf16.msra.mxu0 0
          %672 = vmatpush.bf16.msra.mxu0 0
          %673 = vmatpush.bf16.msra.mxu0 0
          %674 = vmatpush.bf16.msra.mxu0 0
          %675 = vmatpush.bf16.msra.mxu0 0
          %676 = vmatpush.bf16.msra.mxu0 0
          %677 = vmatpush.bf16.msra.mxu0 0
          %678 = vmatpush.bf16.msra.mxu0 %v669
          %679 = vmatmul.bf16.gmra.mxu0 %v666
          %v680 = vpop.f32.mrf.mxu0
          %v681 = vadd.f32 0.0, %v680
          %v682 = vpop.f32.mrf.mxu0
          %v683 = vadd.f32 0.0, %v682
          %684 = vdwg.mxu0
          %v685 = vadd.f32 %v647, %v681
          %v686 = vadd.f32 %v648, %v683
          %s687 = scalar_lea.vmem %s264, 44
          %v688 = vld [vmem:[%s687] sm:$0xf]
          %v690 = vunpack.c.l.b16 %v300
          %v691 = vpack.c.b16 %v690, %v690
          %v692 = vshrl.u32 %v626, 16
          %v694 = vshll.u32 %v626, 16
          %v696 = vrot.slane %v694, 1
          %v697 = vor.u32 %v692, %v696
          %v699 = vshll.u32 %v691, 16
          %v701 = vrot.slane %v699, 1
          %v702 = vsel %vm385, %v697, %v701
          %v704 = vsel %vm333, %v702, 0
          %v707 = vsel %vm337, %v688, 0
          %709 = vmatpush.bf16.msra.mxu0 0
          %710 = vmatpush.bf16.msra.mxu0 0
          %711 = vmatpush.bf16.msra.mxu0 0
          %712 = vmatpush.bf16.msra.mxu0 0
          %713 = vmatpush.bf16.msra.mxu0 0
          %714 = vmatpush.bf16.msra.mxu0 0
          %715 = vmatpush.bf16.msra.mxu0 0
          %716 = vmatpush.bf16.msra.mxu0 %v707
          %717 = vmatmul.bf16.gmra.mxu0 %v704
          %v718 = vpop.f32.mrf.mxu0
          %v719 = vadd.f32 0.0, %v718
          %v720 = vpop.f32.mrf.mxu0
          %v721 = vadd.f32 0.0, %v720
          %722 = vdwg.mxu0
          %v723 = vadd.f32 %v685, %v719
          %v724 = vadd.f32 %v686, %v721
          %s725 = scalar_lea.vmem %s264, 48
          %v726 = vld [vmem:[%s725] sm:$0xf]
          %v729 = vunpack.c.l.b16 %v310
          %v730 = vunpack.c.l.b16 %v311
          %v731 = vpack.c.b16 %v730, %v729
          %v733 = vsel %vm333, %v731, 0
          %v736 = vsel %vm337, %v726, 0
          %738 = vmatpush.bf16.msra.mxu0 0
          %739 = vmatpush.bf16.msra.mxu0 0
          %740 = vmatpush.bf16.msra.mxu0 0
          %741 = vmatpush.bf16.msra.mxu0 0
          %742 = vmatpush.bf16.msra.mxu0 0
          %743 = vmatpush.bf16.msra.mxu0 0
          %744 = vmatpush.bf16.msra.mxu0 0
          %745 = vmatpush.bf16.msra.mxu0 %v736
          %746 = vmatmul.bf16.gmra.mxu0 %v733
          %v747 = vpop.f32.mrf.mxu0
          %v748 = vadd.f32 0.0, %v747
          %v749 = vpop.f32.mrf.mxu0
          %v750 = vadd.f32 0.0, %v749
          %751 = vdwg.mxu0
          %v752 = vadd.f32 %v723, %v748
          %v753 = vadd.f32 %v724, %v750
          %s754 = scalar_lea.vmem %s264, 52
          %v755 = vld [vmem:[%s754] sm:$0xf]
          %v758 = vunpack.c.l.b16 %v322
          %v759 = vunpack.c.l.b16 %v323
          %v760 = vpack.c.b16 %v759, %v758
          %v762 = vsel %vm333, %v760, 0
          %v765 = vsel %vm337, %v755, 0
          %767 = vmatpush.bf16.msra.mxu0 0
          %768 = vmatpush.bf16.msra.mxu0 0
          %769 = vmatpush.bf16.msra.mxu0 0
          %770 = vmatpush.bf16.msra.mxu0 0
          %771 = vmatpush.bf16.msra.mxu0 0
          %772 = vmatpush.bf16.msra.mxu0 0
          %773 = vmatpush.bf16.msra.mxu0 0
          %774 = vmatpush.bf16.msra.mxu0 %v765
          %775 = vmatmul.bf16.gmra.mxu0 %v762
          %v776 = vpop.f32.mrf.mxu0
          %v777 = vadd.f32 0.0, %v776
          %v778 = vpop.f32.mrf.mxu0
          %v779 = vadd.f32 0.0, %v778
          %780 = vdwg.mxu0
          %v781 = vadd.f32 %v752, %v777
          %v782 = vadd.f32 %v753, %v779
          %s783 = scalar_lea.vmem %s264, 56
          %v784 = vld [vmem:[%s783] sm:$0xf]
          %v786 = vunpack.c.l.b16 %v312
          %v787 = vpack.c.b16 %v786, %v786
          %v788 = vshrl.u32 %v731, 16
          %v790 = vshll.u32 %v731, 16
          %v792 = vrot.slane %v790, 1
          %v793 = vor.u32 %v788, %v792
          %v795 = vshll.u32 %v787, 16
          %v797 = vrot.slane %v795, 1
          %v798 = vsel %vm385, %v793, %v797
          %v800 = vsel %vm333, %v798, 0
          %v803 = vsel %vm337, %v784, 0
          %805 = vmatpush.bf16.msra.mxu0 0
          %806 = vmatpush.bf16.msra.mxu0 0
          %807 = vmatpush.bf16.msra.mxu0 0
          %808 = vmatpush.bf16.msra.mxu0 0
          %809 = vmatpush.bf16.msra.mxu0 0
          %810 = vmatpush.bf16.msra.mxu0 0
          %811 = vmatpush.bf16.msra.mxu0 0
          %812 = vmatpush.bf16.msra.mxu0 %v803
          %813 = vmatmul.bf16.gmra.mxu0 %v800
          %v814 = vpop.f32.mrf.mxu0
          %v815 = vadd.f32 0.0, %v814
          %v816 = vpop.f32.mrf.mxu0
          %v817 = vadd.f32 0.0, %v816
          %818 = vdwg.mxu0
          %v819 = vadd.f32 %v781, %v815
          %v820 = vadd.f32 %v782, %v817
          %s821 = scalar_lea.vmem %s264, 60
          %v822 = vld [vmem:[%s821] sm:$0xf]
          %v824 = vunpack.c.l.b16 %v324
          %v825 = vpack.c.b16 %v824, %v824
          %v826 = vshrl.u32 %v760, 16
          %v828 = vshll.u32 %v760, 16
          %v830 = vrot.slane %v828, 1
          %v831 = vor.u32 %v826, %v830
          %v833 = vshll.u32 %v825, 16
          %v835 = vrot.slane %v833, 1
          %v836 = vsel %vm385, %v831, %v835
          %v838 = vsel %vm333, %v836, 0
          %v841 = vsel %vm337, %v822, 0
          %843 = vmatpush.bf16.msra.mxu0 0
          %844 = vmatpush.bf16.msra.mxu0 0
          %845 = vmatpush.bf16.msra.mxu0 0
          %846 = vmatpush.bf16.msra.mxu0 0
          %847 = vmatpush.bf16.msra.mxu0 0
          %848 = vmatpush.bf16.msra.mxu0 0
          %849 = vmatpush.bf16.msra.mxu0 0
          %850 = vmatpush.bf16.msra.mxu0 %v841
          %851 = vmatmul.bf16.gmra.mxu0 %v838
          %v852 = vpop.f32.mrf.mxu0
          %v853 = vadd.f32 0.0, %v852
          %v854 = vpop.f32.mrf.mxu0
          %v855 = vadd.f32 0.0, %v854
          %856 = vdwg.mxu0
          %v857 = vadd.f32 %v819, %v853
          %v858 = vadd.f32 %v820, %v855
          %v860 = vperm.slane %v269, 0
          %v862 = vadd.f32 %v857, %v860
          %v863 = vadd.f32 %v858, %v860
          %vm864 = vcmp.ge.f32.partialorder %v862, 0.0
          %vm865 = vcmp.ge.f32.partialorder %v863, 0.0
          %v866 = vmul.f32 %v862, 0.2
          %v867 = vmul.f32 %v863, 0.2
          %v868 = vsel %vm864, %v862, %v866
          %v869 = vsel %vm865, %v863, %v867
          %v870 = vpack.c.bf16 %v868, %v868
          %v871 = vpack.c.bf16 %v869, %v869
          %s872 = smul.u32 %s271, 2
          %s873 = smul.addr %s872, 4
          %s874 = scalar_lea.vmem %s255, %s873 [#allocation2]
          %875 = vst [vmem:[%s874] sm:$0xf] %v870
          %876 = vst [vmem:[%s874 + $0x4] sm:$0xf] %v871
        $region45: #{tpu_custom_call.1} parent=39 // loop_footer
          %s275 = sadd.s32 1, %s271
        $region46: #{tpu_custom_call.1} parent=39 // loop_footer_branch
          %270 = sbr.rel target = $region42
        $region47: #{tpu_custom_call.1} parent=39 // loop_exit
          _
        %s877 = sand.u32 %s161, 1
        %s878 = scalar_lea.sflag [#allocation3], %s877
        %s879 = sand.u32 %s161, 1
        %s880 = smul.addr %s879, 128
        %s881 = scalar_lea.vmem [#allocation2], %s880
        // Predicated region
        $region48: #{tpu_custom_call.1} parent=39 // pred_check
          %p882 = pneg %p171
        $region49: #{tpu_custom_call.1} parent=39 // pred_check_branch
          %884 = sbr.rel (%p882) target = $region51
        $region50: #{tpu_custom_call.1} parent=39 // pred_region
          %886 = vsyncadd %s878, 0
          %s887 = smul.addr %s23, 32
          %s888 = sadd.s32 %s24, %s887
          %s889 = smul.addr %s888, 4
          %s890 = scalar_lea.hbm %s5, %s889
          %s891 = sshll.u32 %s881, 4
          %s892 = int_to_ptr.vmem [resolvable:$true] %s891
          %s893 = sshll.u32 %s890, 4
          %s894 = int_to_ptr.hbm [resolvable:$true] %s893
          %899 = dma.vmem_to_hbm [thread:$0]  %s892, 2048, %s894, %s878, 64, 64, 4
        $region51: #{tpu_custom_call.1} parent=39 // pred_fallthru
          _
      $region40: #{tpu_custom_call.1} parent=5 // pred_fallthru
        _
      %p900 = scmp.le.s32.totalorder 2, %s14
      // Predicated region
      $region52: #{tpu_custom_call.1} parent=5 // pred_check
        %p901 = pneg %p900
      $region53: #{tpu_custom_call.1} parent=5 // pred_check_branch
        %903 = sbr.rel (%p901) target = $region55
      $region54: #{tpu_custom_call.1} parent=5 // pred_region
        %s904 = ssub.s32 %s14, 2
        // Predicated region
        $region56: #{tpu_custom_call.1} parent=54 // pred_check
          %p905 = pneg %p177
        $region57: #{tpu_custom_call.1} parent=54 // pred_check_branch
          %907 = sbr.rel (%p905) target = $region59
        $region58: #{tpu_custom_call.1} parent=54 // pred_region
          %s908 = sand.u32 %s162, 1
          %s909 = scalar_lea.sflag [#allocation3], %s908
          %s910 = sand.u32 %s162, 1
          %s911 = smul.addr %s910, 128
          %s912 = scalar_lea.vmem [#allocation2], %s911
          %914 = dma.done %s909, 2048
        $region59: #{tpu_custom_call.1} parent=54 // pred_fallthru
          _
      $region55: #{tpu_custom_call.1} parent=5 // pred_fallthru
        _
    $region6: #{tpu_custom_call.1} parent=1 // loop_footer
      %s18 = sadd.s32 1, %s14
    $region7: #{tpu_custom_call.1} parent=1 // loop_footer_branch
      %13 = sbr.rel target = $region3
    $region8: #{tpu_custom_call.1} parent=1 // loop_exit
      _
    %915 = vsyncpa [#allocation3], 1
    %s916 = scalar_lea.sflag [#allocation3], 1
    %917 = vsyncpa %s916, 1

</llo_original>
